<compile_context>
chip_gen: v5e
topology: v5e:2x2
jax: 0.10.0
libtpu: 0.0.40
codegen_flags: <defaults>
</compile_context>

<pallas_src>
import jax
import jax.numpy as jnp
import numpy as np
from jax import lax
from jax.experimental import pallas as pl
from jax.experimental.pallas import tpu as pltpu


# dot_general dimension numbers for 2-D operands.
NN = (((1,), (0,)), ((), ()))   # A @ B
TN = (((0,), (0,)), ((), ()))   # A^T @ B (contract dim 0 of both)


def _gau_kernel(qf_ref, tf_ref,
                wq_ref, bq_ref,          # stacked [query; wfeature]   : (2C, C) bf16, (2C, 1) f32
                ws_ref, bs_ref,          # stacked [support; wfeature] : (2C, C) bf16, (2C, 1) f32
                wre_ref, wrq_ref, br_ref,  # rrfeature split            : (O, C), (O, C) bf16, (O, 1) f32
                out_ref,
                tf_trans_scr, tfw_aug_scr):
    """grid = (B, Nq_tiles).  NCHW-native: channels on sublanes, spatial on lanes.

    qf_ref : (1, C, TILE_NQ) bf16   query feature tile
    tf_ref : (1, C, Nt)      bf16   template features (constant over Nq tiles)
    out_ref: (1, O, TILE_NQ) f32    lane-dense output tile
    tf_trans_scr : VMEM (C,   Nt) bf16  cached support-conv(template)
    tfw_aug_scr  : VMEM (C+8, Nt) bf16  cached wfeature(template) + ones row (+ zero pad)
    """
    f32 = jnp.float32
    bf16 = jnp.bfloat16
    C = qf_ref.shape[1]
    Nt = tf_ref.shape[2]
    nq_idx = pl.program_id(1)

    # ---- template side: computed once per batch element, cached in scratch ----
    # (the Nq grid axis is "arbitrary", so this caching is core-safe)
    @pl.when(nq_idx == 0)
    def _():
        tfv = tf_ref[0]                                                     # (C, Nt) bf16
        tboth = lax.dot_general(ws_ref[...], tfv, NN,
                                preferred_element_type=f32) + bs_ref[...]   # (2C, Nt) f32
        tf_trans_scr[...] = tboth[:C, :].astype(bf16)                       # support conv
        tfw = jnp.maximum(tboth[C:, :], 0.0)                                # wfeature+BN+ReLU
        # ones row (then zeros to an 8-sublane boundary) so the embedding matmul
        # also emits the softmax denominator.
        pad = (lax.broadcasted_iota(jnp.int32, (8, Nt), 0) == 0).astype(f32)
        tfw_aug_scr[0:C, :] = tfw.astype(bf16)
        tfw_aug_scr[C:C + 8, :] = pad.astype(bf16)

    # ---- query side: one stacked matmul replaces two 1x1 convs ----
    qfv = qf_ref[0]                                                         # (C, TNQ) bf16
    qboth = lax.dot_general(wq_ref[...], qfv, NN,
                            preferred_element_type=f32) + bq_ref[...]       # (2C, TNQ) f32
    qf_trans = qboth[:C, :]                                                 # query conv
    qf_w = jnp.maximum(qboth[C:, :], 0.0)                                   # wfeature+BN+ReLU

    # ---- similarity (transposed orientation keeps lanes = Nq everywhere) ----
    # sim_t[t, q] = sum_c tf_trans[c, t] * qf_trans[c, q]
    sim_t = lax.dot_general(tf_trans_scr[...], qf_trans.astype(bf16), TN,
                            preferred_element_type=f32)                     # (Nt, TNQ)

    # ---- softmax over Nt with deferred normalization ----
    sim_t = sim_t - jnp.max(sim_t, axis=0, keepdims=True)
    p = jnp.exp(sim_t).astype(bf16)                                         # (Nt, TNQ)

    # ---- embedding + denominator in one MXU pass (ones row of tfw_aug) ----
    emb_aug = lax.dot_general(tfw_aug_scr[...], p, NN,
                              preferred_element_type=f32)                   # (C+8, TNQ)
    emb = emb_aug[:C, :] * pl.reciprocal(emb_aug[C:C + 1, :], approx=True)  # (C, TNQ)

    # ---- rrfeature: concat([embedding, qf_w]) conv as two K=C dots ----
    out = (lax.dot_general(wre_ref[...], emb.astype(bf16), NN, preferred_element_type=f32)
           + lax.dot_general(wrq_ref[...], qf_w.astype(bf16), NN, preferred_element_type=f32)
           + br_ref[...])
    out_ref[0] = jnp.maximum(out, 0.0).astype(out_ref.dtype)


def _pick_tile_nq(nq, target=512):
    """Lane-friendly Nq tile (multiple of 128/256) that divides Nq, else full Nq."""
    if nq <= target:
        return nq
    for t in (512, 384, 256, 128):
        if t <= target and nq % t == 0:
            return t
    return nq  # TODO(synk): pad Nq to a multiple of 128 for ragged production shapes


def _vmem_budget_bytes(C, O, Nt, tile_nq):
    """Rough per-step VMEM budget (double-buffered tiles + resident template/weights)."""
    bf2, f4 = 2, 4
    in_bufs = 2 * (C * tile_nq * bf2) + 2 * (C * Nt * bf2)
    out_bufs = 2 * (O * tile_nq * f4)
    weights = 2 * (2 * (2 * C * C * bf2 + 2 * C * f4) + 2 * (O * C * bf2) + O * f4)
    scratch = C * Nt * bf2 + (C + 8) * Nt * bf2
    interm = 3 * (Nt * tile_nq * f4) + (2 * C * tile_nq * f4) \
             + ((C + 8) * tile_nq * f4) + 2 * (C * tile_nq * f4)
    total = in_bufs + out_bufs + weights + scratch + interm
    # 2x safety factor + 4 MiB headroom, clamped to [16 MiB, 48 MiB] (v7x-safe).
    return int(min(max(2 * total + (4 << 20), 16 << 20), 48 << 20))


def graph_attention_union(tf_nchw, qf_nchw, params, *, tile_nq_target=512):
    """Pallas implementation of Graph_Attention_Union.forward (eval-mode BN)."""
    B, C, Ht, Wt = tf_nchw.shape
    _, _, Hq, Wq = qf_nchw.shape
    Nt, Nq = Ht * Wt, Hq * Wq
    O = params["br"].shape[0]

    bf16 = jnp.bfloat16
    # Free reshapes (no transposes) + bf16 activations: half the HBM/VMEM traffic.
    tf = tf_nchw.reshape(B, C, Nt).astype(bf16)
    qf = qf_nchw.reshape(B, C, Nq).astype(bf16)

    tile_nq = _pick_tile_nq(Nq, tile_nq_target)
    n_q_tiles = Nq // tile_nq

    const = lambda shp: pl.BlockSpec(shp, lambda b, q: (0, 0))

    flops = 2 * B * ((2 * C) * C * (Nq + Nt)       # two stacked conv matmuls
                     + C * Nq * Nt                 # similarity
                     + (C + 8) * Nq * Nt           # embedding (+denom row)
                     + 2 * C * O * Nq)             # rrfeature (two K=C dots)
    bytes_accessed = (2 * B * (C * Nq + C * Nt)    # bf16 activations in
                      + 4 * B * O * Nq             # f32 output
                      + 2 * (2 * (2 * C * C) + 2 * C * O)   # bf16 weights
                      + 4 * (4 * C + O))                    # f32 biases
    cost = pl.CostEstimate(flops=int(flops),
                           transcendentals=int(B * (Nq * Nt + Nq)),
                           bytes_accessed=int(bytes_accessed))

    out = pl.pallas_call(
        _gau_kernel,
        out_shape=jax.ShapeDtypeStruct((B, O, Nq), jnp.float32),
        grid_spec=pltpu.PrefetchScalarGridSpec(
            num_scalar_prefetch=0,
            grid=(B, n_q_tiles),                    # B parallel, Nq-tiles arbitrary (caching)
            in_specs=[
                pl.BlockSpec((1, C, tile_nq), lambda b, q: (b, 0, q)),  # qf tile (streamed)
                pl.BlockSpec((1, C, Nt),      lambda b, q: (b, 0, 0)),  # tf (resident per b)
                const((2 * C, C)), const((2 * C, 1)),   # stacked query/wfeature W, b
                const((2 * C, C)), const((2 * C, 1)),   # stacked support/wfeature W, b
                const((O, C)),                          # rrfeature W (embedding half)
                const((O, C)),                          # rrfeature W (qf_w half)
                const((O, 1)),                          # rrfeature bias (BN folded)
            ],
            out_specs=pl.BlockSpec((1, O, tile_nq), lambda b, q: (b, 0, q)),
            scratch_shapes=[
                pltpu.VMEM((C, Nt), bf16),              # cached tf_trans
                pltpu.VMEM((C + 8, Nt), bf16),          # cached tf_w + ones row (+pad)
            ],
        ),
        compiler_params=pltpu.CompilerParams(
            dimension_semantics=("parallel", "arbitrary"),
            vmem_limit_bytes=_vmem_budget_bytes(C, O, Nt, tile_nq)),
        cost_estimate=cost,
    )(qf, tf,
      params["wq"], params["bq"],
      params["ws"], params["bs"],
      params["wre"], params["wrq"], params["br"])

    # Free reshape back to NCHW: (B, O, Nq) -> (B, O, Hq, Wq).
    return out.reshape(B, O, Hq, Wq)


# ---------------------------------------------------------------------------
# Deterministic parameter construction (synthetic; mirrors __init__ shapes).
# BN (eval mode) and conv biases are folded host-side; conv weights are then
# stacked ([query; wfeature], [support; wfeature]) and the rrfeature weight is
# split into its embedding / qf_w halves.  All weights cast to bf16.
# ---------------------------------------------------------------------------
def make_params(key, in_channel, out_channel, eps=1e-5):
    ks = jax.random.split(key, 16)
    C, O = in_channel, out_channel

    def u(k, shape, s=0.1):
        return jax.random.uniform(k, shape, jnp.float32, -s, s)

    # query / support: Conv2d(C, C, 1) -> weight (C_out, C_in), bias (C_out,)
    wq_raw, bq = u(ks[0], (C, C)), u(ks[1], (C,))
    ws_raw, bs = u(ks[2], (C, C)), u(ks[3], (C,))

    # wfeature: Conv2d(C, C, 1) + BatchNorm2d(C) (eval mode) + ReLU
    ww_raw, bw_conv = u(ks[4], (C, C)), u(ks[5], (C,))
    g1 = 1.0 + u(ks[6], (C,))
    beta1 = u(ks[7], (C,))
    mean1 = u(ks[8], (C,))
    var1 = 0.5 + jax.random.uniform(ks[9], (C,), jnp.float32, 0.0, 1.0)
    s1 = g1 / jnp.sqrt(var1 + eps)
    ww = ww_raw * s1[:, None]                      # (C_out, C_in), BN scale folded
    bw = (bw_conv - mean1) * s1 + beta1            # (C_out,)

    # rrfeature: Conv2d(2C, O, 1) + BatchNorm2d(O) (eval mode) + ReLU
    wr_raw, br_conv = u(ks[10], (O, 2 * C)), u(ks[11], (O,))
    g2 = 1.0 + u(ks[12], (O,))
    beta2 = u(ks[13], (O,))
    mean2 = u(ks[14], (O,))
    var2 = 0.5 + jax.random.uniform(ks[15], (O,), jnp.float32, 0.0, 1.0)
    s2 = g2 / jnp.sqrt(var2 + eps)
    wr = wr_raw * s2[:, None]                      # (O, 2C)
    br = (br_conv - mean2) * s2 + beta2

    bf16 = jnp.bfloat16
    params = {
        # stacked [query; wfeature] applied to qf
        "wq": jnp.concatenate([wq_raw, ww], axis=0).astype(bf16),          # (2C, C)
        "bq": jnp.concatenate([bq, bw], axis=0)[:, None],                  # (2C, 1)
        # stacked [support; wfeature] applied to tf
        "ws": jnp.concatenate([ws_raw, ww], axis=0).astype(bf16),          # (2C, C)
        "bs": jnp.concatenate([bs, bw], axis=0)[:, None],                  # (2C, 1)
        # rrfeature split: first C input channels act on embedding, last C on qf_w
        "wre": wr[:, :C].astype(bf16),                                     # (O, C)
        "wrq": wr[:, C:].astype(bf16),                                     # (O, C)
        "br": br[:, None],                                                 # (O, 1)
    }
    raw = {
        "wq": wq_raw, "bq": bq, "ws": ws_raw, "bs": bs,
        "ww": ww_raw, "bw": bw_conv, "g1": g1, "beta1": beta1, "mean1": mean1, "var1": var1,
        "wr": wr_raw, "br": br_conv, "g2": g2, "beta2": beta2, "mean2": mean2, "var2": var2,
        "eps": eps,
    }
    return params, raw


# ---------------------------------------------------------------------------
# Pure-JAX f32 reference following the PyTorch NCHW code path exactly.
# ---------------------------------------------------------------------------
def reference(tf, qf, raw):
    def conv1x1(x, w, b):
        return jnp.einsum("oc,bchw->bohw", w, x) + b[None, :, None, None]

    def bn(x, g, beta, mean, var, eps):
        return (x - mean[None, :, None, None]) / jnp.sqrt(var[None, :, None, None] + eps) \
               * g[None, :, None, None] + beta[None, :, None, None]

    qf_trans = conv1x1(qf, raw["wq"], raw["bq"])
    tf_trans = conv1x1(tf, raw["ws"], raw["bs"])
    qf_w = jax.nn.relu(bn(conv1x1(qf, raw["ww"], raw["bw"]),
                          raw["g1"], raw["beta1"], raw["mean1"], raw["var1"], raw["eps"]))
    tf_w = jax.nn.relu(bn(conv1x1(tf, raw["ww"], raw["bw"]),
                          raw["g1"], raw["beta1"], raw["mean1"], raw["var1"], raw["eps"]))

    B, C, Hq, Wq = qf_trans.shape
    _, _, Ht, Wt = tf_trans.shape
    tf_trans_plain = tf_trans.reshape(B, C, Ht * Wt)
    tf_g_plain = tf_w.reshape(B, C, Ht * Wt).transpose(0, 2, 1)
    qf_trans_plain = qf_trans.reshape(B, C, Hq * Wq).transpose(0, 2, 1)
    similar = jnp.einsum("bqc,bck->bqk", qf_trans_plain, tf_trans_plain)
    similar = jax.nn.softmax(similar, axis=2)
    embedding = jnp.einsum("bqk,bkc->bqc", similar, tf_g_plain).transpose(0, 2, 1)
    embedding = embedding.reshape(B, C, Hq, Wq)
    output = jnp.concatenate([embedding, qf_w], axis=1)
    output = jax.nn.relu(bn(conv1x1(output, raw["wr"], raw["br"]),
                            raw["g2"], raw["beta2"], raw["mean2"], raw["var2"], raw["eps"]))
    return output


if __name__ == "__main__":
    B, C, O = 2, 32, 16
    Ht = Wt = 8   # template spatial
    Hq = Wq = 8   # query spatial

    key = jax.random.PRNGKey(0)
    k_tf, k_qf, k_p = jax.random.split(key, 3)
    tf_in = jax.random.normal(k_tf, (B, C, Ht, Wt), jnp.float32)   # NCHW, like PyTorch
    qf_in = jax.random.normal(k_qf, (B, C, Hq, Wq), jnp.float32)

    params, raw = make_params(k_p, C, O)

    out = jax.block_until_ready(graph_attention_union(tf_in, qf_in, params))
    ref = jax.block_until_ready(reference(tf_in, qf_in, raw))

    # bf16 activations/weights on the MXU + approx reciprocal => looser tolerance than pure f32.
    np.testing.assert_allclose(np.asarray(out), np.asarray(ref), rtol=2e-2, atol=2e-2)
    assert out.shape == (B, O, Hq, Wq)
    print("KERNEL_OK")
</pallas_src>

<mosaic_0001>
module attributes {stable_mosaic.version = 11 : i64} {
  func.func @_gau_kernel(%arg0: i32, %arg1: i32, %arg2: memref<1x32x64xbf16, #tpu.memory_space<vmem>>, %arg3: memref<1x32x64xbf16, #tpu.memory_space<vmem>>, %arg4: memref<64x32xbf16, #tpu.memory_space<vmem>>, %arg5: memref<64x1xf32, #tpu.memory_space<vmem>>, %arg6: memref<64x32xbf16, #tpu.memory_space<vmem>>, %arg7: memref<64x1xf32, #tpu.memory_space<vmem>>, %arg8: memref<16x32xbf16, #tpu.memory_space<vmem>>, %arg9: memref<16x32xbf16, #tpu.memory_space<vmem>>, %arg10: memref<16x1xf32, #tpu.memory_space<vmem>>, %arg11: memref<1x16x64xf32, #tpu.memory_space<vmem>>, %arg12: memref<32x64xbf16, #tpu.memory_space<vmem>>, %arg13: memref<40x64xbf16, #tpu.memory_space<vmem>>) attributes {dimension_semantics = [#tpu.dimension_semantics<parallel>, #tpu.dimension_semantics<arbitrary>], iteration_bounds = array<i64: 2, 1>, scalar_prefetch = 0 : i64, scratch_operands = 2 : i64, tpu.core_type = #tpu.core_type<tc>, window_params = [{transform_indices = @transform_0, window_bounds = array<i64: 1, 32, 64>}, {transform_indices = @transform_1, window_bounds = array<i64: 1, 32, 64>}, {pipeline_mode = #tpu.pipeline_mode<synchronous>, transform_indices = @transform_2, window_bounds = array<i64: 64, 32>}, {pipeline_mode = #tpu.pipeline_mode<synchronous>, transform_indices = @transform_3, window_bounds = array<i64: 64, 1>}, {pipeline_mode = #tpu.pipeline_mode<synchronous>, transform_indices = @transform_4, window_bounds = array<i64: 64, 32>}, {pipeline_mode = #tpu.pipeline_mode<synchronous>, transform_indices = @transform_5, window_bounds = array<i64: 64, 1>}, {pipeline_mode = #tpu.pipeline_mode<synchronous>, transform_indices = @transform_6, window_bounds = array<i64: 16, 32>}, {pipeline_mode = #tpu.pipeline_mode<synchronous>, transform_indices = @transform_7, window_bounds = array<i64: 16, 32>}, {pipeline_mode = #tpu.pipeline_mode<synchronous>, transform_indices = @transform_8, window_bounds = array<i64: 16, 1>}, {transform_indices = @transform_9, window_bounds = array<i64: 1, 16, 64>}]} {
    %c0_i32 = arith.constant 0 : i32
    %0 = arith.cmpi eq, %arg1, %c0_i32 : i32
    %1 = arith.extui %0 : i1 to i32
    %c0_i32_0 = arith.constant 0 : i32
    %2 = arith.cmpi ne, %1, %c0_i32_0 : i32
    scf.if %2 {
      %c0_27 = arith.constant 0 : index
      %c0_28 = arith.constant 0 : index
      %c0_29 = arith.constant 0 : index
      %45 = vector.load %arg3[%c0_27, %c0_28, %c0_29] : memref<1x32x64xbf16, #tpu.memory_space<vmem>>, vector<1x32x64xbf16>
      %46 = vector.shape_cast %45 : vector<1x32x64xbf16> to vector<32x64xbf16>
      %c0_30 = arith.constant 0 : index
      %c0_31 = arith.constant 0 : index
      %47 = vector.load %arg6[%c0_30, %c0_31] : memref<64x32xbf16, #tpu.memory_space<vmem>>, vector<64x32xbf16>
      %cst_32 = arith.constant dense<0.000000e+00> : vector<64x64xf32>
      %48 = tpu.matmul %47, %46, %cst_32 {dimension_numbers = #tpu.dot_dimension_numbers<[1], [0], [0], [1], [0, 0, 1, 1], [], []>} : vector<64x32xbf16>, vector<32x64xbf16>, vector<64x64xf32> -> vector<64x64xf32>
      %c0_33 = arith.constant 0 : index
      %c0_34 = arith.constant 0 : index
      %49 = vector.load %arg7[%c0_33, %c0_34] : memref<64x1xf32, #tpu.memory_space<vmem>>, vector<64x1xf32>
      %50 = vector.broadcast %49 : vector<64x1xf32> to vector<64x64xf32>
      %51 = arith.addf %48, %50 : vector<64x64xf32>
      %52 = vector.extract_strided_slice %51 {offsets = [0, 0], sizes = [32, 64], strides = [1, 1]} : vector<64x64xf32> to vector<32x64xf32>
      %53 = arith.truncf %52 : vector<32x64xf32> to vector<32x64xbf16>
      %c0_35 = arith.constant 0 : index
      %c0_36 = arith.constant 0 : index
      %54 = vector.load %arg12[%c0_35, %c0_36] : memref<32x64xbf16, #tpu.memory_space<vmem>>, vector<32x64xbf16>
      tpu.vector_store %arg12[%c0_35, %c0_36], %53 {strides = array<i32>} : memref<32x64xbf16, #tpu.memory_space<vmem>>, vector<32x64xbf16>,
      %55 = vector.extract_strided_slice %51 {offsets = [32, 0], sizes = [32, 64], strides = [1, 1]} : vector<64x64xf32> to vector<32x64xf32>
      %cst_37 = arith.constant 0.000000e+00 : f32
      %56 = vector.broadcast %cst_37 : f32 to vector<32x64xf32>
      %57 = arith.maximumf %55, %56 : vector<32x64xf32>
      %58 = tpu.iota {dimensions = array<i32: 0>} : vector<8x64xi32>
      %c0_i32_38 = arith.constant 0 : i32
      %59 = vector.broadcast %c0_i32_38 : i32 to vector<8x64xi32>
      %60 = arith.cmpi eq, %58, %59 : vector<8x64xi32>
      %61 = arith.extui %60 : vector<8x64xi1> to vector<8x64xi32>
      %62 = arith.sitofp %61 : vector<8x64xi32> to vector<8x64xf32>
      %63 = arith.truncf %57 : vector<32x64xf32> to vector<32x64xbf16>
      %c0_39 = arith.constant 0 : index
      %c0_40 = arith.constant 0 : index
      %64 = vector.load %arg13[%c0_39, %c0_40] : memref<40x64xbf16, #tpu.memory_space<vmem>>, vector<32x64xbf16>
      tpu.vector_store %arg13[%c0_39, %c0_40], %63 {strides = array<i32>} : memref<40x64xbf16, #tpu.memory_space<vmem>>, vector<32x64xbf16>,
      %65 = arith.truncf %62 : vector<8x64xf32> to vector<8x64xbf16>
      %c32 = arith.constant 32 : index
      %c0_41 = arith.constant 0 : index
      %66 = vector.load %arg13[%c32, %c0_41] : memref<40x64xbf16, #tpu.memory_space<vmem>>, vector<8x64xbf16>
      tpu.vector_store %arg13[%c32, %c0_41], %65 {strides = array<i32>} : memref<40x64xbf16, #tpu.memory_space<vmem>>, vector<8x64xbf16>,
    } else {
    }
    %c0 = arith.constant 0 : index
    %c0_1 = arith.constant 0 : index
    %c0_2 = arith.constant 0 : index
    %3 = vector.load %arg2[%c0, %c0_1, %c0_2] : memref<1x32x64xbf16, #tpu.memory_space<vmem>>, vector<1x32x64xbf16>
    %4 = vector.shape_cast %3 : vector<1x32x64xbf16> to vector<32x64xbf16>
    %c0_3 = arith.constant 0 : index
    %c0_4 = arith.constant 0 : index
    %5 = vector.load %arg4[%c0_3, %c0_4] : memref<64x32xbf16, #tpu.memory_space<vmem>>, vector<64x32xbf16>
    %cst = arith.constant dense<0.000000e+00> : vector<64x64xf32>
    %6 = tpu.matmul %5, %4, %cst {dimension_numbers = #tpu.dot_dimension_numbers<[1], [0], [0], [1], [0, 0, 1, 1], [], []>} : vector<64x32xbf16>, vector<32x64xbf16>, vector<64x64xf32> -> vector<64x64xf32>
    %c0_5 = arith.constant 0 : index
    %c0_6 = arith.constant 0 : index
    %7 = vector.load %arg5[%c0_5, %c0_6] : memref<64x1xf32, #tpu.memory_space<vmem>>, vector<64x1xf32>
    %8 = vector.broadcast %7 : vector<64x1xf32> to vector<64x64xf32>
    %9 = arith.addf %6, %8 : vector<64x64xf32>
    %10 = vector.extract_strided_slice %9 {offsets = [0, 0], sizes = [32, 64], strides = [1, 1]} : vector<64x64xf32> to vector<32x64xf32>
    %11 = vector.extract_strided_slice %9 {offsets = [32, 0], sizes = [32, 64], strides = [1, 1]} : vector<64x64xf32> to vector<32x64xf32>
    %cst_7 = arith.constant 0.000000e+00 : f32
    %12 = vector.broadcast %cst_7 : f32 to vector<32x64xf32>
    %13 = arith.maximumf %11, %12 : vector<32x64xf32>
    %c0_8 = arith.constant 0 : index
    %c0_9 = arith.constant 0 : index
    %14 = vector.load %arg12[%c0_8, %c0_9] : memref<32x64xbf16, #tpu.memory_space<vmem>>, vector<32x64xbf16>
    %15 = arith.truncf %10 : vector<32x64xf32> to vector<32x64xbf16>
    %cst_10 = arith.constant dense<0.000000e+00> : vector<64x64xf32>
    %16 = tpu.matmul %14, %15, %cst_10 {dimension_numbers = #tpu.dot_dimension_numbers<[0], [0], [1], [1], [0, 1, 1, 1], [], []>} : vector<32x64xbf16>, vector<32x64xbf16>, vector<64x64xf32> -> vector<64x64xf32>
    %cst_11 = arith.constant dense<0xFF800000> : vector<64xf32>
    %17 = vector.multi_reduction <maximumf>, %16, %cst_11 [0] : vector<64x64xf32> to vector<64xf32>
    %18 = vector.shape_cast %17 : vector<64xf32> to vector<1x64xf32>
    %19 = vector.broadcast %18 : vector<1x64xf32> to vector<64x64xf32>
    %20 = arith.subf %16, %19 : vector<64x64xf32>
    %21 = math.exp %20 : vector<64x64xf32>
    %22 = arith.truncf %21 : vector<64x64xf32> to vector<64x64xbf16>
    %c0_12 = arith.constant 0 : index
    %c0_13 = arith.constant 0 : index
    %23 = vector.load %arg13[%c0_12, %c0_13] : memref<40x64xbf16, #tpu.memory_space<vmem>>, vector<40x64xbf16>
    %cst_14 = arith.constant dense<0.000000e+00> : vector<40x64xf32>
    %24 = tpu.matmul %23, %22, %cst_14 {dimension_numbers = #tpu.dot_dimension_numbers<[1], [0], [0], [1], [0, 0, 1, 1], [], []>} : vector<40x64xbf16>, vector<64x64xbf16>, vector<40x64xf32> -> vector<40x64xf32>
    %25 = vector.extract_strided_slice %24 {offsets = [0, 0], sizes = [32, 64], strides = [1, 1]} : vector<40x64xf32> to vector<32x64xf32>
    %26 = vector.extract_strided_slice %24 {offsets = [32, 0], sizes = [1, 64], strides = [1, 1]} : vector<40x64xf32> to vector<1x64xf32>
    %27 = tpu.reciprocal %26 {approx = true} : vector<1x64xf32> -> vector<1x64xf32>
    %28 = vector.broadcast %27 : vector<1x64xf32> to vector<32x64xf32>
    %29 = arith.mulf %25, %28 : vector<32x64xf32>
    %c0_15 = arith.constant 0 : index
    %c0_16 = arith.constant 0 : index
    %30 = vector.load %arg8[%c0_15, %c0_16] : memref<16x32xbf16, #tpu.memory_space<vmem>>, vector<16x32xbf16>
    %31 = arith.truncf %29 : vector<32x64xf32> to vector<32x64xbf16>
    %cst_17 = arith.constant dense<0.000000e+00> : vector<16x64xf32>
    %32 = tpu.matmul %30, %31, %cst_17 {dimension_numbers = #tpu.dot_dimension_numbers<[1], [0], [0], [1], [0, 0, 1, 1], [], []>} : vector<16x32xbf16>, vector<32x64xbf16>, vector<16x64xf32> -> vector<16x64xf32>
    %c0_18 = arith.constant 0 : index
    %c0_19 = arith.constant 0 : index
    %33 = vector.load %arg9[%c0_18, %c0_19] : memref<16x32xbf16, #tpu.memory_space<vmem>>, vector<16x32xbf16>
    %34 = arith.truncf %13 : vector<32x64xf32> to vector<32x64xbf16>
    %cst_20 = arith.constant dense<0.000000e+00> : vector<16x64xf32>
    %35 = tpu.matmul %33, %34, %cst_20 {dimension_numbers = #tpu.dot_dimension_numbers<[1], [0], [0], [1], [0, 0, 1, 1], [], []>} : vector<16x32xbf16>, vector<32x64xbf16>, vector<16x64xf32> -> vector<16x64xf32>
    %36 = arith.addf %32, %35 : vector<16x64xf32>
    %c0_21 = arith.constant 0 : index
    %c0_22 = arith.constant 0 : index
    %37 = vector.load %arg10[%c0_21, %c0_22] : memref<16x1xf32, #tpu.memory_space<vmem>>, vector<16x1xf32>
    %38 = vector.broadcast %37 : vector<16x1xf32> to vector<16x64xf32>
    %39 = arith.addf %36, %38 : vector<16x64xf32>
    %cst_23 = arith.constant 0.000000e+00 : f32
    %40 = vector.broadcast %cst_23 : f32 to vector<16x64xf32>
    %41 = arith.maximumf %39, %40 : vector<16x64xf32>
    %c0_24 = arith.constant 0 : index
    %c0_25 = arith.constant 0 : index
    %c0_26 = arith.constant 0 : index
    %42 = vector.load %arg11[%c0_24, %c0_25, %c0_26] : memref<1x16x64xf32, #tpu.memory_space<vmem>>, vector<1x16x64xf32>
    %43 = vector.shape_cast %42 : vector<1x16x64xf32> to vector<16x64xf32>
    %44 = vector.shape_cast %41 : vector<16x64xf32> to vector<1x16x64xf32>
    tpu.vector_store %arg11[%c0_24, %c0_25, %c0_26], %44 {strides = array<i32>} : memref<1x16x64xf32, #tpu.memory_space<vmem>>, vector<1x16x64xf32>,
    return
  }
  func.func @transform_0(%arg0: i32, %arg1: i32) -> (i32, i32, i32) {
    %c0_i32 = arith.constant 0 : i32
    %c0_i32_0 = arith.constant 0 : i32
    return %arg0, %c0_i32, %arg1 : i32, i32, i32
  }
  func.func @transform_1(%arg0: i32, %arg1: i32) -> (i32, i32, i32) {
    %c0_i32 = arith.constant 0 : i32
    %c0_i32_0 = arith.constant 0 : i32
    %c0_i32_1 = arith.constant 0 : i32
    return %arg0, %c0_i32, %c0_i32_0 : i32, i32, i32
  }
  func.func @transform_2(%arg0: i32, %arg1: i32) -> (i32, i32) {
    %c0_i32 = arith.constant 0 : i32
    %c0_i32_0 = arith.constant 0 : i32
    %c0_i32_1 = arith.constant 0 : i32
    return %c0_i32, %c0_i32_0 : i32, i32
  }
  func.func @transform_3(%arg0: i32, %arg1: i32) -> (i32, i32) {
    %c0_i32 = arith.constant 0 : i32
    %c0_i32_0 = arith.constant 0 : i32
    %c0_i32_1 = arith.constant 0 : i32
    return %c0_i32, %c0_i32_0 : i32, i32
  }
  func.func @transform_4(%arg0: i32, %arg1: i32) -> (i32, i32) {
    %c0_i32 = arith.constant 0 : i32
    %c0_i32_0 = arith.constant 0 : i32
    %c0_i32_1 = arith.constant 0 : i32
    return %c0_i32, %c0_i32_0 : i32, i32
  }
  func.func @transform_5(%arg0: i32, %arg1: i32) -> (i32, i32) {
    %c0_i32 = arith.constant 0 : i32
    %c0_i32_0 = arith.constant 0 : i32
    %c0_i32_1 = arith.constant 0 : i32
    return %c0_i32, %c0_i32_0 : i32, i32
  }
  func.func @transform_6(%arg0: i32, %arg1: i32) -> (i32, i32) {
    %c0_i32 = arith.constant 0 : i32
    %c0_i32_0 = arith.constant 0 : i32
    %c0_i32_1 = arith.constant 0 : i32
    return %c0_i32, %c0_i32_0 : i32, i32
  }
  func.func @transform_7(%arg0: i32, %arg1: i32) -> (i32, i32) {
    %c0_i32 = arith.constant 0 : i32
    %c0_i32_0 = arith.constant 0 : i32
    %c0_i32_1 = arith.constant 0 : i32
    return %c0_i32, %c0_i32_0 : i32, i32
  }
  func.func @transform_8(%arg0: i32, %arg1: i32) -> (i32, i32) {
    %c0_i32 = arith.constant 0 : i32
    %c0_i32_0 = arith.constant 0 : i32
    %c0_i32_1 = arith.constant 0 : i32
    return %c0_i32, %c0_i32_0 : i32, i32
  }
  func.func @transform_9(%arg0: i32, %arg1: i32) -> (i32, i32, i32) {
    %c0_i32 = arith.constant 0 : i32
    %c0_i32_0 = arith.constant 0 : i32
    return %arg0, %c0_i32, %arg1 : i32, i32, i32
  }
}

</mosaic_0001>

<llo_original>
// kernel: tpu_custom_call.1
$region0: #{tpu_custom_call.1}
  #allocation0 [shape = 'u32[]', space=smem, size = 0x4, offset = 0x4, fixed_abs, tag = 'smem constant byte address 0x4 - core index']
  #allocation1 [shape = 'u32[72,128]{1,0:T(1,128)}', space=vmem, size = 0x9000, scoped, tag = 'internal scratch']
  #allocation2 [shape = 'bf16[32,64]{1,0:T(8,128)(2,1)}', space=vmem, size = 0x2000, scoped, tag = 'scratch operand']
  #allocation3 [shape = 'bf16[40,64]{1,0:T(8,128)(2,1)}', space=vmem, size = 0x2800, scoped, tag = 'scratch operand']
  %s0 = inlined_call_operand.vmem [shape: bf16[2,32,64], index: 0, kind: input, shape index: {}]
  %s1 = inlined_call_operand.vmem [shape: bf16[2,32,64], index: 1, kind: input, shape index: {}]
  %s2 = inlined_call_operand.vmem [shape: bf16[64,32], index: 2, kind: input, shape index: {}]
  %s3 = inlined_call_operand.vmem [shape: f32[64,1], index: 3, kind: input, shape index: {}]
  %s4 = inlined_call_operand.vmem [shape: bf16[64,32], index: 4, kind: input, shape index: {}]
  %s5 = inlined_call_operand.vmem [shape: f32[64,1], index: 5, kind: input, shape index: {}]
  %s6 = inlined_call_operand.vmem [shape: bf16[16,32], index: 6, kind: input, shape index: {}]
  %s7 = inlined_call_operand.vmem [shape: bf16[16,32], index: 7, kind: input, shape index: {}]
  %s8 = inlined_call_operand.vmem [shape: f32[16,1], index: 8, kind: input, shape index: {}]
  %s9 = inlined_call_operand.hbm [shape: f32[2,16,64], index: 9, kind: output, shape index: {}]
  %s10 = sld [smem:[#allocation0]]
  $region73: #{tpu_custom_call.1} parent=0
    _
  %s12 = ssub.s32 1, %s10
  %s13 = scalar_select 0, %s12, %s10
  $region1: #{tpu_custom_call.1} parent=0
    #allocation4 [shape = 'u8[16384]{0}', space=vmem, size = 0x4000, scoped, tag = 'output window, operand 0']
    #allocation5 [shape = 's32[2]{0}', space=sflag, size = 0x8, scoped, tag = 'scoped memory for tpu_custom_call.1']
    %14 = vsyncpa [#allocation5], 0
    %s15 = scalar_lea.sflag [#allocation5], 1
    %16 = vsyncpa %s15, 0
    loop: start=0, step=1, limit=4
    $region2: #{tpu_custom_call.1} parent=1 // loop_pre_header
      _
    $region3: #{tpu_custom_call.1} parent=1 // loop_header
      %s18 = sphi 0, %s22
      %p19 = scmp.ge.s32.totalorder %s18, 4
      %s25 = sphi 0, %s37
      %s26 = sphi 0, %s33
      %s27 = sphi 0, %s25
      %s28 = sphi 0, %s26
      %s29 = sphi 0, %s27
      %s30 = sphi 0, %s28
      %s42 = sphi 0, %s44
      %s45 = sphi 0, %s42
      %s46 = sphi 0, %s45
      %s62 = sphi 0, %s46
      %s68 = sphi 0, %s70
      %s71 = sphi 0, %s68
      %s72 = sphi 0, %s71
      %s88 = sphi 0, %s72
      %s92 = sphi 0, %s92
      %s94 = sphi 0, %s92
      %s95 = sphi 0, %s94
      %s109 = sphi 0, %s95
      %s113 = sphi 0, %s113
      %s115 = sphi 0, %s113
      %s116 = sphi 0, %s115
      %s130 = sphi 0, %s116
      %s134 = sphi 0, %s134
      %s136 = sphi 0, %s134
      %s137 = sphi 0, %s136
      %s151 = sphi 0, %s137
      %s155 = sphi 0, %s155
      %s157 = sphi 0, %s155
      %s158 = sphi 0, %s157
      %s172 = sphi 0, %s158
      %s176 = sphi 0, %s176
      %s178 = sphi 0, %s176
      %s179 = sphi 0, %s178
      %s193 = sphi 0, %s179
      %s197 = sphi 0, %s197
      %s199 = sphi 0, %s197
      %s200 = sphi 0, %s199
      %s214 = sphi 0, %s200
      %s218 = sphi 0, %s218
      %s220 = sphi 0, %s218
      %s221 = sphi 0, %s220
      %s235 = sphi 0, %s221
      %s243 = sphi 0, %s245
      %s246 = sphi 0, %s243
      %s247 = sphi 0, %s246
      %s263 = sphi 0, %s247
    $region4: #{tpu_custom_call.1} parent=1 // loop_header_branch
      %21 = sbr.rel (%p19) target = $region8
    $region5: #{tpu_custom_call.1} parent=1 // loop_body
      %s23 = ssub.s32 %s18, 1
      %s24 = ssub.s32 %s18, 2
      %s31 = sadd.s32 1, %s26
      %p32 = scmp.ge.s32.totalorder %s31, 1
      %s33 = scalar_select %p32, 0, %s31
      %s34 = sadd.s32 1, %s25
      %s35 = scalar_select %p32, %s34, %s25
      %p36 = scmp.ge.s32.totalorder %s35, 2
      %s37 = scalar_select %p36, 0, %s35
      %s38 = ssub.s32 %s25, %s37
      %s39 = ssub.s32 %s26, %s33
      %s40 = sor.u32 %s38, %s39
      %p41 = scmp.eq.s32.totalorder %s40, 0
      %s43 = sadd.s32 %s42, 1
      %s44 = scalar_select %p41, %s42, %s43
      %p47 = pneg %p41
      %p48 = scmp.eq.s32.totalorder %s18, 1
      %p49 = por %p47, %p48
      %p50 = scmp.ne.s32.totalorder %s42, %s45
      %p51 = scmp.eq.s32.totalorder %s18, 0
      %p52 = por %p50, %p51
      %p53 = scmp.ne.s32.totalorder %s42, %s45
      %p54 = scmp.eq.s32.totalorder %s23, 1
      %p55 = por %p53, %p54
      %p56 = scmp.ne.s32.totalorder %s45, %s46
      %p57 = scmp.eq.s32.totalorder %s23, 0
      %p58 = por %p56, %p57
      %p59 = scmp.ne.s32.totalorder %s45, %s46
      %p60 = scmp.eq.s32.totalorder %s24, 1
      %p61 = por %p59, %p60
      %p63 = scmp.ne.s32.totalorder %s46, %s62
      %p64 = scmp.eq.s32.totalorder %s24, 0
      %p65 = por %p63, %p64
      %s66 = ssub.s32 %s25, %s37
      %p67 = scmp.eq.s32.totalorder %s66, 0
      %s69 = sadd.s32 %s68, 1
      %s70 = scalar_select %p67, %s68, %s69
      %p73 = pneg %p67
      %p74 = scmp.eq.s32.totalorder %s18, 1
      %p75 = por %p73, %p74
      %p76 = scmp.ne.s32.totalorder %s68, %s71
      %p77 = scmp.eq.s32.totalorder %s18, 0
      %p78 = por %p76, %p77
      %p79 = scmp.ne.s32.totalorder %s68, %s71
      %p80 = scmp.eq.s32.totalorder %s23, 1
      %p81 = por %p79, %p80
      %p82 = scmp.ne.s32.totalorder %s71, %s72
      %p83 = scmp.eq.s32.totalorder %s23, 0
      %p84 = por %p82, %p83
      %p85 = scmp.ne.s32.totalorder %s71, %s72
      %p86 = scmp.eq.s32.totalorder %s24, 1
      %p87 = por %p85, %p86
      %p89 = scmp.ne.s32.totalorder %s72, %s88
      %p90 = scmp.eq.s32.totalorder %s24, 0
      %p91 = por %p89, %p90
      %s93 = sadd.s32 %s92, 1
      %p96 = scmp.eq.s32.totalorder %s18, 1
      %p97 = scmp.ne.s32.totalorder %s92, %s94
      %p98 = scmp.eq.s32.totalorder %s18, 0
      %p99 = por %p97, %p98
      %p100 = scmp.ne.s32.totalorder %s92, %s94
      %p101 = scmp.eq.s32.totalorder %s23, 1
      %p102 = por %p100, %p101
      %p103 = scmp.ne.s32.totalorder %s94, %s95
      %p104 = scmp.eq.s32.totalorder %s23, 0
      %p105 = por %p103, %p104
      %p106 = scmp.ne.s32.totalorder %s94, %s95
      %p107 = scmp.eq.s32.totalorder %s24, 1
      %p108 = por %p106, %p107
      %p110 = scmp.ne.s32.totalorder %s95, %s109
      %p111 = scmp.eq.s32.totalorder %s24, 0
      %p112 = por %p110, %p111
      %s114 = sadd.s32 %s113, 1
      %p117 = scmp.eq.s32.totalorder %s18, 1
      %p118 = scmp.ne.s32.totalorder %s113, %s115
      %p119 = scmp.eq.s32.totalorder %s18, 0
      %p120 = por %p118, %p119
      %p121 = scmp.ne.s32.totalorder %s113, %s115
      %p122 = scmp.eq.s32.totalorder %s23, 1
      %p123 = por %p121, %p122
      %p124 = scmp.ne.s32.totalorder %s115, %s116
      %p125 = scmp.eq.s32.totalorder %s23, 0
      %p126 = por %p124, %p125
      %p127 = scmp.ne.s32.totalorder %s115, %s116
      %p128 = scmp.eq.s32.totalorder %s24, 1
      %p129 = por %p127, %p128
      %p131 = scmp.ne.s32.totalorder %s116, %s130
      %p132 = scmp.eq.s32.totalorder %s24, 0
      %p133 = por %p131, %p132
      %s135 = sadd.s32 %s134, 1
      %p138 = scmp.eq.s32.totalorder %s18, 1
      %p139 = scmp.ne.s32.totalorder %s134, %s136
      %p140 = scmp.eq.s32.totalorder %s18, 0
      %p141 = por %p139, %p140
      %p142 = scmp.ne.s32.totalorder %s134, %s136
      %p143 = scmp.eq.s32.totalorder %s23, 1
      %p144 = por %p142, %p143
      %p145 = scmp.ne.s32.totalorder %s136, %s137
      %p146 = scmp.eq.s32.totalorder %s23, 0
      %p147 = por %p145, %p146
      %p148 = scmp.ne.s32.totalorder %s136, %s137
      %p149 = scmp.eq.s32.totalorder %s24, 1
      %p150 = por %p148, %p149
      %p152 = scmp.ne.s32.totalorder %s137, %s151
      %p153 = scmp.eq.s32.totalorder %s24, 0
      %p154 = por %p152, %p153
      %s156 = sadd.s32 %s155, 1
      %p159 = scmp.eq.s32.totalorder %s18, 1
      %p160 = scmp.ne.s32.totalorder %s155, %s157
      %p161 = scmp.eq.s32.totalorder %s18, 0
      %p162 = por %p160, %p161
      %p163 = scmp.ne.s32.totalorder %s155, %s157
      %p164 = scmp.eq.s32.totalorder %s23, 1
      %p165 = por %p163, %p164
      %p166 = scmp.ne.s32.totalorder %s157, %s158
      %p167 = scmp.eq.s32.totalorder %s23, 0
      %p168 = por %p166, %p167
      %p169 = scmp.ne.s32.totalorder %s157, %s158
      %p170 = scmp.eq.s32.totalorder %s24, 1
      %p171 = por %p169, %p170
      %p173 = scmp.ne.s32.totalorder %s158, %s172
      %p174 = scmp.eq.s32.totalorder %s24, 0
      %p175 = por %p173, %p174
      %s177 = sadd.s32 %s176, 1
      %p180 = scmp.eq.s32.totalorder %s18, 1
      %p181 = scmp.ne.s32.totalorder %s176, %s178
      %p182 = scmp.eq.s32.totalorder %s18, 0
      %p183 = por %p181, %p182
      %p184 = scmp.ne.s32.totalorder %s176, %s178
      %p185 = scmp.eq.s32.totalorder %s23, 1
      %p186 = por %p184, %p185
      %p187 = scmp.ne.s32.totalorder %s178, %s179
      %p188 = scmp.eq.s32.totalorder %s23, 0
      %p189 = por %p187, %p188
      %p190 = scmp.ne.s32.totalorder %s178, %s179
      %p191 = scmp.eq.s32.totalorder %s24, 1
      %p192 = por %p190, %p191
      %p194 = scmp.ne.s32.totalorder %s179, %s193
      %p195 = scmp.eq.s32.totalorder %s24, 0
      %p196 = por %p194, %p195
      %s198 = sadd.s32 %s197, 1
      %p201 = scmp.eq.s32.totalorder %s18, 1
      %p202 = scmp.ne.s32.totalorder %s197, %s199
      %p203 = scmp.eq.s32.totalorder %s18, 0
      %p204 = por %p202, %p203
      %p205 = scmp.ne.s32.totalorder %s197, %s199
      %p206 = scmp.eq.s32.totalorder %s23, 1
      %p207 = por %p205, %p206
      %p208 = scmp.ne.s32.totalorder %s199, %s200
      %p209 = scmp.eq.s32.totalorder %s23, 0
      %p210 = por %p208, %p209
      %p211 = scmp.ne.s32.totalorder %s199, %s200
      %p212 = scmp.eq.s32.totalorder %s24, 1
      %p213 = por %p211, %p212
      %p215 = scmp.ne.s32.totalorder %s200, %s214
      %p216 = scmp.eq.s32.totalorder %s24, 0
      %p217 = por %p215, %p216
      %s219 = sadd.s32 %s218, 1
      %p222 = scmp.eq.s32.totalorder %s18, 1
      %p223 = scmp.ne.s32.totalorder %s218, %s220
      %p224 = scmp.eq.s32.totalorder %s18, 0
      %p225 = por %p223, %p224
      %p226 = scmp.ne.s32.totalorder %s218, %s220
      %p227 = scmp.eq.s32.totalorder %s23, 1
      %p228 = por %p226, %p227
      %p229 = scmp.ne.s32.totalorder %s220, %s221
      %p230 = scmp.eq.s32.totalorder %s23, 0
      %p231 = por %p229, %p230
      %p232 = scmp.ne.s32.totalorder %s220, %s221
      %p233 = scmp.eq.s32.totalorder %s24, 1
      %p234 = por %p232, %p233
      %p236 = scmp.ne.s32.totalorder %s221, %s235
      %p237 = scmp.eq.s32.totalorder %s24, 0
      %p238 = por %p236, %p237
      %s239 = ssub.s32 %s25, %s37
      %s240 = ssub.s32 %s26, %s33
      %s241 = sor.u32 %s239, %s240
      %p242 = scmp.eq.s32.totalorder %s241, 0
      %s244 = sadd.s32 %s243, 1
      %s245 = scalar_select %p242, %s243, %s244
      %p248 = pneg %p242
      %p249 = scmp.eq.s32.totalorder %s18, 1
      %p250 = por %p248, %p249
      %p251 = scmp.ne.s32.totalorder %s243, %s246
      %p252 = scmp.eq.s32.totalorder %s18, 0
      %p253 = por %p251, %p252
      %p254 = scmp.ne.s32.totalorder %s243, %s246
      %p255 = scmp.eq.s32.totalorder %s23, 1
      %p256 = por %p254, %p255
      %p257 = scmp.ne.s32.totalorder %s246, %s247
      %p258 = scmp.eq.s32.totalorder %s23, 0
      %p259 = por %p257, %p258
      %p260 = scmp.ne.s32.totalorder %s246, %s247
      %p261 = scmp.eq.s32.totalorder %s24, 1
      %p262 = por %p260, %p261
      %p264 = scmp.ne.s32.totalorder %s247, %s263
      %p265 = scmp.eq.s32.totalorder %s24, 0
      %p266 = por %p264, %p265
      %p267 = scmp.le.s32.totalorder 1, %s18
      %p268 = scmp.lt.s32.totalorder %s18, 3
      %p269 = pnand %p267, %p268
      %p270 = pneg %p269
      // Predicated region
      $region9: #{tpu_custom_call.1} parent=5 // pred_check
        _
      $region10: #{tpu_custom_call.1} parent=5 // pred_check_branch
        %272 = sbr.rel (%p269) target = $region12
      $region11: #{tpu_custom_call.1} parent=5 // pred_region
        %s273 = ssub.s32 %s18, 1
        // Predicated region
        $region13: #{tpu_custom_call.1} parent=11 // pred_check
          %p274 = pneg %p105
        $region14: #{tpu_custom_call.1} parent=11 // pred_check_branch
          %276 = sbr.rel (%p274) target = $region16
        $region15: #{tpu_custom_call.1} parent=11 // pred_region
          _
        $region16: #{tpu_custom_call.1} parent=11 // pred_fallthru
          _
        // Predicated region
        $region17: #{tpu_custom_call.1} parent=11 // pred_check
          %p277 = pneg %p126
        $region18: #{tpu_custom_call.1} parent=11 // pred_check_branch
          %279 = sbr.rel (%p277) target = $region20
        $region19: #{tpu_custom_call.1} parent=11 // pred_region
          _
        $region20: #{tpu_custom_call.1} parent=11 // pred_fallthru
          _
        // Predicated region
        $region21: #{tpu_custom_call.1} parent=11 // pred_check
          %p280 = pneg %p147
        $region22: #{tpu_custom_call.1} parent=11 // pred_check_branch
          %282 = sbr.rel (%p280) target = $region24
        $region23: #{tpu_custom_call.1} parent=11 // pred_region
          _
        $region24: #{tpu_custom_call.1} parent=11 // pred_fallthru
          _
        // Predicated region
        $region25: #{tpu_custom_call.1} parent=11 // pred_check
          %p283 = pneg %p168
        $region26: #{tpu_custom_call.1} parent=11 // pred_check_branch
          %285 = sbr.rel (%p283) target = $region28
        $region27: #{tpu_custom_call.1} parent=11 // pred_region
          _
        $region28: #{tpu_custom_call.1} parent=11 // pred_fallthru
          _
        // Predicated region
        $region29: #{tpu_custom_call.1} parent=11 // pred_check
          %p286 = pneg %p189
        $region30: #{tpu_custom_call.1} parent=11 // pred_check_branch
          %288 = sbr.rel (%p286) target = $region32
        $region31: #{tpu_custom_call.1} parent=11 // pred_region
          _
        $region32: #{tpu_custom_call.1} parent=11 // pred_fallthru
          _
        // Predicated region
        $region33: #{tpu_custom_call.1} parent=11 // pred_check
          %p289 = pneg %p210
        $region34: #{tpu_custom_call.1} parent=11 // pred_check_branch
          %291 = sbr.rel (%p289) target = $region36
        $region35: #{tpu_custom_call.1} parent=11 // pred_region
          _
        $region36: #{tpu_custom_call.1} parent=11 // pred_fallthru
          _
        // Predicated region
        $region37: #{tpu_custom_call.1} parent=11 // pred_check
          %p292 = pneg %p231
        $region38: #{tpu_custom_call.1} parent=11 // pred_check_branch
          %294 = sbr.rel (%p292) target = $region40
        $region39: #{tpu_custom_call.1} parent=11 // pred_region
          _
        $region40: #{tpu_custom_call.1} parent=11 // pred_fallthru
          _
      $region12: #{tpu_custom_call.1} parent=5 // pred_fallthru
        _
      %p295 = scmp.lt.s32.totalorder %s18, 2
      // Predicated region
      $region41: #{tpu_custom_call.1} parent=5 // pred_check
        %p296 = pneg %p295
      $region42: #{tpu_custom_call.1} parent=5 // pred_check_branch
        %298 = sbr.rel (%p296) target = $region44
      $region43: #{tpu_custom_call.1} parent=5 // pred_region
        // Predicated region
        $region45: #{tpu_custom_call.1} parent=43 // pred_check
          %p299 = pneg %p52
        $region46: #{tpu_custom_call.1} parent=43 // pred_check_branch
          %301 = sbr.rel (%p299) target = $region48
        $region47: #{tpu_custom_call.1} parent=43 // pred_region
          %p302 = scmp.lt.s32.totalorder %s25, 1
          %s303 = scalar_select %p302, %s25, 1
          %p304 = scmp.lt.s32.totalorder %s26, 0
          %s305 = scalar_select %p304, %s26, 0
          %s306 = smul.addr %s303, 4
          %s307 = sadd.s32 %s305, %s306
          %s308 = smul.addr %s307, 4
          %s309 = scalar_lea.vmem %s0, %s308
        $region48: #{tpu_custom_call.1} parent=43 // pred_fallthru
          _
        // Predicated region
        $region49: #{tpu_custom_call.1} parent=43 // pred_check
          %p310 = pneg %p78
        $region50: #{tpu_custom_call.1} parent=43 // pred_check_branch
          %312 = sbr.rel (%p310) target = $region52
        $region51: #{tpu_custom_call.1} parent=43 // pred_region
          %p313 = scmp.lt.s32.totalorder %s25, 1
          %s314 = scalar_select %p313, %s25, 1
          %s315 = smul.addr %s314, 4
          %s316 = smul.addr %s315, 4
          %s317 = scalar_lea.vmem %s1, %s316
        $region52: #{tpu_custom_call.1} parent=43 // pred_fallthru
          _
      $region44: #{tpu_custom_call.1} parent=5 // pred_fallthru
        _
      %p318 = scmp.le.s32.totalorder 1, %s18
      %p319 = scmp.lt.s32.totalorder %s18, 3
      %p320 = pnand %p318, %p319
      %p321 = pneg %p320
      // Predicated region
      $region53: #{tpu_custom_call.1} parent=5 // pred_check
        _
      $region54: #{tpu_custom_call.1} parent=5 // pred_check_branch
        %323 = sbr.rel (%p320) target = $region56
      $region55: #{tpu_custom_call.1} parent=5 // pred_region
        %s324 = ssub.s32 %s18, 1
        %p325 = scmp.lt.s32.totalorder %s27, 1
        %s326 = scalar_select %p325, %s27, 1
        %p327 = scmp.lt.s32.totalorder %s28, 0
        %s328 = scalar_select %p327, %s28, 0
        %s329 = smul.addr %s326, 4
        %s330 = sadd.s32 %s328, %s329
        %s331 = smul.addr %s330, 4
        %s332 = scalar_lea.vmem %s0, %s331
        %p333 = pneg %p58
        %p334 = pneg %p55
        %p335 = scmp.lt.s32.totalorder %s27, 1
        %s336 = scalar_select %p335, %s27, 1
        %s337 = smul.addr %s336, 4
        %s338 = smul.addr %s337, 4
        %s339 = scalar_lea.vmem %s1, %s338
        %p340 = pneg %p84
        %p341 = pneg %p81
        %p342 = pneg %p105
        %p343 = pneg %p102
        %p344 = pneg %p126
        %p345 = pneg %p123
        %p346 = pneg %p147
        %p347 = pneg %p144
        %p348 = pneg %p168
        %p349 = pneg %p165
        %p350 = pneg %p189
        %p351 = pneg %p186
        %p352 = pneg %p210
        %p353 = pneg %p207
        %p354 = pneg %p231
        %p355 = pneg %p228
        %p356 = pneg %p259
        %p357 = pneg %p256
        %s358 = sand.u32 %s246, 1
        %s359 = scalar_lea.sflag [#allocation5], %s358
        %s360 = sand.u32 %s246, 1
        %s361 = smul.addr %s360, 16
        %s362 = scalar_lea.vmem [#allocation4], %s361
        %p363 = scmp.lt.s32.totalorder %s27, 1
        %s364 = scalar_select %p363, %s27, 1
        %p365 = scmp.lt.s32.totalorder %s28, 0
        %s366 = scalar_select %p365, %s28, 0
        %s367 = smul.addr %s364, 4
        %s368 = sadd.s32 %s366, %s367
        %s369 = smul.addr %s368, 4
        %s370 = scalar_lea.vmem %s0, %s369
        %p371 = scmp.lt.s32.totalorder %s27, 1
        %s372 = scalar_select %p371, %s27, 1
        %s373 = smul.addr %s372, 4
        %s374 = smul.addr %s373, 4
        %s375 = scalar_lea.vmem %s1, %s374
        %p377 = scmp.eq.s32.totalorder %s28, 0
        // Predicated region
        $region57: #{tpu_custom_call.1} parent=55 // pred_check
          %p378 = pneg %p377
        $region58: #{tpu_custom_call.1} parent=55 // pred_check_branch
          %380 = sbr.rel (%p378) target = $region60
        $region59: #{tpu_custom_call.1} parent=55 // pred_region
          %v381 = vld [vmem:[%s375] sm:$0xf]
          %v382 = vld [vmem:[%s375 + $0x4] sm:$0xf]
          %v383 = vld [vmem:[%s375 + $0x8] sm:$0xf]
          %v384 = vld [vmem:[%s375 + $0xc] sm:$0xf]
          %v385 = vld [vmem:[%s4] sm:$0xf]
          %v386 = vld [vmem:[%s4 + $0x4] sm:$0xf]
          %v387 = vld [vmem:[%s4 + $0x8] sm:$0xf]
          %v388 = vld [vmem:[%s4 + $0xc] sm:$0xf]
          %v389 = vld [vmem:[%s4 + $0x10] sm:$0xf]
          %v390 = vld [vmem:[%s4 + $0x14] sm:$0xf]
          %v391 = vld [vmem:[%s4 + $0x18] sm:$0xf]
          %v392 = vld [vmem:[%s4 + $0x1c] sm:$0xf]
          %v393 = vld [vmem:[%s5] sm:$0xff]
          %v394 = vld [vmem:[%s5 + $0x8] sm:$0xff]
          %v395 = vld [vmem:[%s5 + $0x10] sm:$0xff]
          %v396 = vld [vmem:[%s5 + $0x18] sm:$0xff]
          %v397 = vld [vmem:[%s5 + $0x20] sm:$0xff]
          %v398 = vld [vmem:[%s5 + $0x28] sm:$0xff]
          %v399 = vld [vmem:[%s5 + $0x30] sm:$0xff]
          %v400 = vld [vmem:[%s5 + $0x38] sm:$0xff]
          %402 = vset.pattern.permute.xlu0 0
          %403 = vperm.xlu0 %402, %v393
          %v404 = vpop.permute.xlu0 %403
          %407 = vset.pattern.permute.xlu0 0
          %408 = vperm.xlu0 %407, %v394
          %v409 = vpop.permute.xlu0 %408
          %412 = vset.pattern.permute.xlu0 0
          %413 = vperm.xlu0 %412, %v395
          %v414 = vpop.permute.xlu0 %413
          %417 = vset.pattern.permute.xlu0 0
          %418 = vperm.xlu0 %417, %v396
          %v419 = vpop.permute.xlu0 %418
          %422 = vset.pattern.permute.xlu0 0
          %423 = vperm.xlu0 %422, %v397
          %v424 = vpop.permute.xlu0 %423
          %427 = vset.pattern.permute.xlu0 0
          %428 = vperm.xlu0 %427, %v398
          %v429 = vpop.permute.xlu0 %428
          %432 = vset.pattern.permute.xlu0 0
          %433 = vperm.xlu0 %432, %v399
          %v434 = vpop.permute.xlu0 %433
          %437 = vset.pattern.permute.xlu0 0
          %438 = vperm.xlu0 %437, %v400
          %v439 = vpop.permute.xlu0 %438
          %v449 = vunpack.c.l.b16 %v385
          %v450 = vunpack.c.l.b16 %v386
          %v451 = vunpack.c.l.b16 %v387
          %v452 = vunpack.c.l.b16 %v388
          %v453 = vunpack.c.l.b16 %v389
          %v454 = vunpack.c.l.b16 %v390
          %v455 = vunpack.c.l.b16 %v391
          %v456 = vunpack.c.l.b16 %v392
          %v457 = vpack.c.b16 %v450, %v449
          %v458 = vpack.c.b16 %v452, %v451
          %v459 = vpack.c.b16 %v454, %v453
          %v460 = vpack.c.b16 %v456, %v455
          %v465 = vunpack.c.l.b16 %v381
          %v466 = vunpack.c.l.b16 %v382
          %v467 = vunpack.c.l.b16 %v383
          %v468 = vunpack.c.l.b16 %v384
          %v469 = vpack.c.b16 %v466, %v465
          %v470 = vpack.c.b16 %v468, %v467
          %vm473 = vcmask 261120
          %v475 = vsel %vm473, %v457, 0
          %v478 = vsel %vm473, %v458, 0
          %v481 = vsel %vm473, %v459, 0
          %v484 = vsel %vm473, %v460, 0
          %486 = vmatpush.bf16.msra.mxu0 0
          %487 = vmatpush.bf16.msra.mxu0 0
          %488 = vmatpush.bf16.msra.mxu0 0
          %489 = vmatpush.bf16.msra.mxu0 0
          %490 = vmatpush.bf16.msra.mxu0 0
          %491 = vmatpush.bf16.msra.mxu0 0
          %492 = vmatpush.bf16.msra.mxu0 %v470
          %493 = vmatpush.bf16.msra.mxu0 %v469
          %494 = vmatmul.bf16.gmra.mxu0 %v475
          %v495 = vpop.f32.mrf.mxu0
          %v496 = vadd.f32 %v404, %v495
          %v497 = vpop.f32.mrf.mxu0
          %v498 = vadd.f32 %v409, %v497
          %499 = vmatmul.bf16.gmra.mxu0 %v478
          %v500 = vpop.f32.mrf.mxu0
          %v501 = vadd.f32 %v414, %v500
          %v502 = vpop.f32.mrf.mxu0
          %v503 = vadd.f32 %v419, %v502
          %504 = vmatmul.bf16.gmra.mxu0 %v481
          %v505 = vpop.f32.mrf.mxu0
          %v506 = vadd.f32 %v424, %v505
          %v507 = vpop.f32.mrf.mxu0
          %v508 = vadd.f32 %v429, %v507
          %509 = vmatmul.bf16.gmra.mxu0 %v484
          %v510 = vpop.f32.mrf.mxu0
          %v511 = vadd.f32 %v434, %v510
          %v512 = vpop.f32.mrf.mxu0
          %v513 = vadd.f32 %v439, %v512
          %514 = vdwg.mxu0
          %v515 = vpack.c.bf16 %v496, %v496
          %v516 = vpack.c.bf16 %v498, %v498
          %v517 = vpack.c.bf16 %v501, %v501
          %v518 = vpack.c.bf16 %v503, %v503
          %vm519 = vcmask 519168
          %520 = vst.msk [vmem:[#allocation2] sm:$0xf] %vm519, %v515
          %521 = vst.msk [vmem:[#allocation2 + $0x4] sm:$0xf] %vm519, %v516
          %522 = vst.msk [vmem:[#allocation2 + $0x8] sm:$0xf] %vm519, %v517
          %523 = vst.msk [vmem:[#allocation2 + $0xc] sm:$0xf] %vm519, %v518
          %v524 = vmax.f32 %v506, 0.0
          %v525 = vmax.f32 %v508, 0.0
          %v526 = vmax.f32 %v511, 0.0
          %v527 = vmax.f32 %v513, 0.0
          %v528 = vlaneseq
          %v529 = vshrl.u32 %v528, 7
          %vm530 = vcmp.eq.s32.totalorder %v529, 0
          %v531 = vpack.c.bf16 %v524, %v524
          %v532 = vpack.c.bf16 %v525, %v525
          %v533 = vpack.c.bf16 %v526, %v526
          %v534 = vpack.c.bf16 %v527, %v527
          %535 = vst.msk [vmem:[#allocation3] sm:$0xf] %vm519, %v531
          %536 = vst.msk [vmem:[#allocation3 + $0x4] sm:$0xf] %vm519, %v532
          %537 = vst.msk [vmem:[#allocation3 + $0x8] sm:$0xf] %vm519, %v533
          %538 = vst.msk [vmem:[#allocation3 + $0xc] sm:$0xf] %vm519, %v534
          %v539 = vsel %vm530, 1, 0
          %v540 = vcvt.s32.f32 %v539
          %v541 = vpack.c.bf16 %v540, %v540
          %542 = vst.msk [vmem:[#allocation3 + $0x10] sm:$0xf] %vm519, %v541
        $region60: #{tpu_custom_call.1} parent=55 // pred_fallthru
          _
        %v543 = vld [vmem:[%s370] sm:$0xf]
        %v544 = vld [vmem:[%s370 + $0x4] sm:$0xf]
        %v545 = vld [vmem:[%s370 + $0x8] sm:$0xf]
        %v546 = vld [vmem:[%s370 + $0xc] sm:$0xf]
        %v547 = vld [vmem:[%s2] sm:$0xf]
        %v548 = vld [vmem:[%s2 + $0x4] sm:$0xf]
        %v549 = vld [vmem:[%s2 + $0x8] sm:$0xf]
        %v550 = vld [vmem:[%s2 + $0xc] sm:$0xf]
        %v551 = vld [vmem:[%s2 + $0x10] sm:$0xf]
        %v552 = vld [vmem:[%s2 + $0x14] sm:$0xf]
        %v553 = vld [vmem:[%s2 + $0x18] sm:$0xf]
        %v554 = vld [vmem:[%s2 + $0x1c] sm:$0xf]
        %v555 = vld [vmem:[%s3] sm:$0xff]
        %v556 = vld [vmem:[%s3 + $0x8] sm:$0xff]
        %v557 = vld [vmem:[%s3 + $0x10] sm:$0xff]
        %v558 = vld [vmem:[%s3 + $0x18] sm:$0xff]
        %v559 = vld [vmem:[%s3 + $0x20] sm:$0xff]
        %v560 = vld [vmem:[%s3 + $0x28] sm:$0xff]
        %v561 = vld [vmem:[%s3 + $0x30] sm:$0xff]
        %v562 = vld [vmem:[%s3 + $0x38] sm:$0xff]
        %564 = vset.pattern.permute.xlu0 0
        %565 = vperm.xlu0 %564, %v555
        %v566 = vpop.permute.xlu0 %565
        %569 = vset.pattern.permute.xlu0 0
        %570 = vperm.xlu0 %569, %v556
        %v571 = vpop.permute.xlu0 %570
        %574 = vset.pattern.permute.xlu0 0
        %575 = vperm.xlu0 %574, %v557
        %v576 = vpop.permute.xlu0 %575
        %579 = vset.pattern.permute.xlu0 0
        %580 = vperm.xlu0 %579, %v558
        %v581 = vpop.permute.xlu0 %580
        %584 = vset.pattern.permute.xlu0 0
        %585 = vperm.xlu0 %584, %v559
        %v586 = vpop.permute.xlu0 %585
        %589 = vset.pattern.permute.xlu0 0
        %590 = vperm.xlu0 %589, %v560
        %v591 = vpop.permute.xlu0 %590
        %594 = vset.pattern.permute.xlu0 0
        %595 = vperm.xlu0 %594, %v561
        %v596 = vpop.permute.xlu0 %595
        %599 = vset.pattern.permute.xlu0 0
        %600 = vperm.xlu0 %599, %v562
        %v601 = vpop.permute.xlu0 %600
        %v611 = vunpack.c.l.b16 %v547
        %v612 = vunpack.c.l.b16 %v548
        %v613 = vunpack.c.l.b16 %v549
        %v614 = vunpack.c.l.b16 %v550
        %v615 = vunpack.c.l.b16 %v551
        %v616 = vunpack.c.l.b16 %v552
        %v617 = vunpack.c.l.b16 %v553
        %v618 = vunpack.c.l.b16 %v554
        %v619 = vpack.c.b16 %v612, %v611
        %v620 = vpack.c.b16 %v614, %v613
        %v621 = vpack.c.b16 %v616, %v615
        %v622 = vpack.c.b16 %v618, %v617
        %v627 = vunpack.c.l.b16 %v543
        %v628 = vunpack.c.l.b16 %v544
        %v629 = vunpack.c.l.b16 %v545
        %v630 = vunpack.c.l.b16 %v546
        %v631 = vpack.c.b16 %v628, %v627
        %v632 = vpack.c.b16 %v630, %v629
        %vm635 = vcmask 261120
        %v637 = vsel %vm635, %v619, 0
        %v640 = vsel %vm635, %v620, 0
        %v643 = vsel %vm635, %v621, 0
        %v646 = vsel %vm635, %v622, 0
        %648 = vmatpush.bf16.msra.mxu0 0
        %649 = vmatpush.bf16.msra.mxu0 0
        %650 = vmatpush.bf16.msra.mxu0 0
        %651 = vmatpush.bf16.msra.mxu0 0
        %652 = vmatpush.bf16.msra.mxu0 0
        %653 = vmatpush.bf16.msra.mxu0 0
        %654 = vmatpush.bf16.msra.mxu0 %v632
        %655 = vmatpush.bf16.msra.mxu0 %v631
        %656 = vmatmul.bf16.gmra.mxu0 %v637
        %v657 = vpop.f32.mrf.mxu0
        %v658 = vadd.f32 %v566, %v657
        %v659 = vpop.f32.mrf.mxu0
        %v660 = vadd.f32 %v571, %v659
        %661 = vmatmul.bf16.gmra.mxu0 %v640
        %v662 = vpop.f32.mrf.mxu0
        %v663 = vadd.f32 %v576, %v662
        %v664 = vpop.f32.mrf.mxu0
        %v665 = vadd.f32 %v581, %v664
        %666 = vmatmul.bf16.gmra.mxu0 %v643
        %v667 = vpop.f32.mrf.mxu0
        %v668 = vadd.f32 %v586, %v667
        %v669 = vpop.f32.mrf.mxu0
        %v670 = vadd.f32 %v591, %v669
        %671 = vmatmul.bf16.gmra.mxu0 %v646
        %v672 = vpop.f32.mrf.mxu0
        %v673 = vadd.f32 %v596, %v672
        %v674 = vpop.f32.mrf.mxu0
        %v675 = vadd.f32 %v601, %v674
        %676 = vdwg.mxu0
        %v677 = vmax.f32 %v668, 0.0
        %v678 = vmax.f32 %v670, 0.0
        %v679 = vmax.f32 %v673, 0.0
        %v680 = vmax.f32 %v675, 0.0
        %v681 = vld [vmem:[#allocation2] sm:$0xf]
        %v682 = vld [vmem:[#allocation2 + $0x4] sm:$0xf]
        %v683 = vld [vmem:[#allocation2 + $0x8] sm:$0xf]
        %v684 = vld [vmem:[#allocation2 + $0xc] sm:$0xf]
        %v685 = vpack.c.bf16 %v660, %v658
        %v686 = vpack.c.bf16 %v665, %v663
        %v691 = vunpack.c.l.b16 %v681
        %v692 = vunpack.c.l.b16 %v682
        %v693 = vunpack.c.l.b16 %v683
        %v694 = vunpack.c.l.b16 %v684
        %v695 = vpack.c.b16 %v692, %v691
        %v696 = vpack.c.b16 %v694, %v693
        %699 = vxpose.xlu0.c.b16.start [1/8] %v695, 128
        %700 = vxpose.xlu0.c.b16.cont [2/8] %v696, 128
        %701 = vxpose.xlu0.c.b16.cont [3/8] 0, 128
        %702 = vxpose.xlu0.c.b16.cont [4/8] 0, 128
        %703 = vxpose.xlu0.c.b16.cont [5/8] 0, 128
        %704 = vxpose.xlu0.c.b16.cont [6/8] 0, 128
        %705 = vxpose.xlu0.c.b16.cont [7/8] 0, 128
        %706 = vxpose.xlu0.c.b16.end [8/8] 0, 128
        %v707 = vpop.trf.xlu0
        %v708 = vpop.trf.xlu0
        %v709 = vpop.trf.xlu0
        %v710 = vpop.trf.xlu0
        %v711 = vpop.trf.xlu0
        %v712 = vpop.trf.xlu0
        %v713 = vpop.trf.xlu0
        %v714 = vpop.trf.xlu0
        %v716 = vsel %vm635, %v707, 0
        %v719 = vsel %vm635, %v708, 0
        %v722 = vsel %vm635, %v709, 0
        %v725 = vsel %vm635, %v710, 0
        %727 = vmatpush.bf16.msra.mxu0 0
        %728 = vmatpush.bf16.msra.mxu0 0
        %729 = vmatpush.bf16.msra.mxu0 0
        %730 = vmatpush.bf16.msra.mxu0 0
        %731 = vmatpush.bf16.msra.mxu0 0
        %732 = vmatpush.bf16.msra.mxu0 0
        %733 = vmatpush.bf16.msra.mxu0 %v686
        %734 = vmatpush.bf16.msra.mxu0 %v685
        %735 = vmatmul.bf16.gmra.mxu0 %v716
        %v736 = vpop.f32.mrf.mxu0
        %v737 = vadd.f32 0.0, %v736
        %v738 = vpop.f32.mrf.mxu0
        %v739 = vadd.f32 0.0, %v738
        %740 = vmatmul.bf16.gmra.mxu0 %v719
        %v741 = vpop.f32.mrf.mxu0
        %v742 = vadd.f32 0.0, %v741
        %v743 = vpop.f32.mrf.mxu0
        %v744 = vadd.f32 0.0, %v743
        %745 = vmatmul.bf16.gmra.mxu0 %v722
        %v746 = vpop.f32.mrf.mxu0
        %v747 = vadd.f32 0.0, %v746
        %v748 = vpop.f32.mrf.mxu0
        %v749 = vadd.f32 0.0, %v748
        %750 = vmatmul.bf16.gmra.mxu0 %v725
        %v751 = vpop.f32.mrf.mxu0
        %v752 = vadd.f32 0.0, %v751
        %v753 = vpop.f32.mrf.mxu0
        %v754 = vadd.f32 0.0, %v753
        %755 = vdwg.mxu0
        %vm756 = vcmask 523264
        %v757 = vsel %vm756, %v737, -inf
        %v758 = vsel %vm756, %v739, -inf
        %v759 = vsel %vm756, %v742, -inf
        %v760 = vsel %vm756, %v744, -inf
        %v761 = vsel %vm756, %v747, -inf
        %v762 = vmax.f32 %v757, %v761
        %v763 = vsel %vm756, %v749, -inf
        %v764 = vmax.f32 %v758, %v763
        %v765 = vsel %vm756, %v752, -inf
        %v766 = vmax.f32 %v759, %v765
        %v767 = vsel %vm756, %v754, -inf
        %v768 = vmax.f32 %v760, %v767
        %v769 = vmax.f32 %v762, %v764
        %v770 = vmax.f32 %v766, %v768
        %v771 = vmax.f32 %v769, %v770
        %v772 = vrot.slane %v771, 4
        %v773 = vmax.f32 %v771, %v772
        %v774 = vrot.slane %v773, 2
        %v775 = vmax.f32 %v773, %v774
        %v776 = vrot.slane %v775, 1
        %v777 = vmax.f32 %v775, %v776
        %v778 = vsub.f32 %v737, %v777
        %v779 = vsub.f32 %v739, %v777
        %v780 = vsub.f32 %v742, %v777
        %v781 = vsub.f32 %v744, %v777
        %v782 = vsub.f32 %v747, %v777
        %v783 = vsub.f32 %v749, %v777
        %v784 = vsub.f32 %v752, %v777
        %v785 = vsub.f32 %v754, %v777
        %v786 = vmul.f32 %v778, 1.442695
        %v787 = vpow.pop %v786
        %v788 = vmul.f32 %v779, 1.442695
        %v789 = vpow.pop %v788
        %v790 = vmul.f32 %v780, 1.442695
        %v791 = vpow.pop %v790
        %v792 = vmul.f32 %v781, 1.442695
        %v793 = vpow.pop %v792
        %v794 = vmul.f32 %v782, 1.442695
        %v795 = vpow.pop %v794
        %v796 = vmul.f32 %v783, 1.442695
        %v797 = vpow.pop %v796
        %v798 = vmul.f32 %v784, 1.442695
        %v799 = vpow.pop %v798
        %v800 = vmul.f32 %v785, 1.442695
        %v801 = vpow.pop %v800
        %v802 = vpack.c.bf16 %v789, %v787
        %v803 = vpack.c.bf16 %v793, %v791
        %v804 = vpack.c.bf16 %v797, %v795
        %v805 = vpack.c.bf16 %v801, %v799
        %v806 = vld [vmem:[#allocation3] sm:$0xf]
        %v807 = vld [vmem:[#allocation3 + $0x4] sm:$0xf]
        %v808 = vld [vmem:[#allocation3 + $0x8] sm:$0xf]
        %v809 = vld [vmem:[#allocation3 + $0xc] sm:$0xf]
        %v810 = vld [vmem:[#allocation3 + $0x10] sm:$0xf]
        %v816 = vunpack.c.l.b16 %v806
        %v817 = vunpack.c.l.b16 %v807
        %v818 = vunpack.c.l.b16 %v808
        %v819 = vunpack.c.l.b16 %v809
        %v820 = vunpack.c.l.b16 %v810
        %v821 = vpack.c.b16 %v817, %v816
        %v822 = vpack.c.b16 %v819, %v818
        %v823 = vpack.c.b16 %v820, %v820
        %v825 = vsel %vm756, %v821, 0
        %v828 = vsel %vm756, %v822, 0
        %v831 = vsel %vm756, %v823, 0
        %833 = vmatpush.bf16.msra.mxu0 0
        %834 = vmatpush.bf16.msra.mxu0 0
        %835 = vmatpush.bf16.msra.mxu0 0
        %836 = vmatpush.bf16.msra.mxu0 0
        %837 = vmatpush.bf16.msra.mxu0 %v805
        %838 = vmatpush.bf16.msra.mxu0 %v804
        %839 = vmatpush.bf16.msra.mxu0 %v803
        %840 = vmatpush.bf16.msra.mxu0 %v802
        %841 = vmatmul.bf16.gmra.mxu0 %v825
        %v842 = vpop.f32.mrf.mxu0
        %v843 = vadd.f32 0.0, %v842
        %v844 = vpop.f32.mrf.mxu0
        %v845 = vadd.f32 0.0, %v844
        %846 = vmatmul.bf16.gmra.mxu0 %v828
        %v847 = vpop.f32.mrf.mxu0
        %v848 = vadd.f32 0.0, %v847
        %v849 = vpop.f32.mrf.mxu0
        %v850 = vadd.f32 0.0, %v849
        %851 = vmatmul.bf16.gmra.mxu0 %v831
        %v852 = vpop.f32.mrf.mxu0
        %v853 = vadd.f32 0.0, %v852
        %v854 = vpop.f32.mrf.mxu0
        %855 = vdwg.mxu0
        %v856 = vrcp.pop %v853
        %v857 = vperm.slane %v856, 0
        %v858 = vmul.f32 %v843, %v857
        %v859 = vmul.f32 %v845, %v857
        %v860 = vmul.f32 %v848, %v857
        %v861 = vmul.f32 %v850, %v857
        %v862 = vld [vmem:[%s6] sm:$0xf]
        %v863 = vld [vmem:[%s6 + $0x4] sm:$0xf]
        %v864 = vpack.c.bf16 %v859, %v858
        %v865 = vpack.c.bf16 %v861, %v860
        %v866 = vld [vmem:[%s7] sm:$0xf]
        %v867 = vld [vmem:[%s7 + $0x4] sm:$0xf]
        %v868 = vpack.c.bf16 %v678, %v677
        %v869 = vpack.c.bf16 %v680, %v679
        %v872 = vunpack.c.l.b16 %v866
        %v873 = vunpack.c.l.b16 %v867
        %v874 = vpack.c.b16 %v873, %v872
        %v876 = vsel %vm635, %v874, 0
        %878 = vmatpush.bf16.msra.mxu0 0
        %879 = vmatpush.bf16.msra.mxu0 0
        %880 = vmatpush.bf16.msra.mxu0 0
        %881 = vmatpush.bf16.msra.mxu0 0
        %882 = vmatpush.bf16.msra.mxu0 0
        %883 = vmatpush.bf16.msra.mxu0 0
        %884 = vmatpush.bf16.msra.mxu0 %v869
        %885 = vmatpush.bf16.msra.mxu0 %v868
        %886 = vmatmul.bf16.gmra.mxu0 %v876
        %v887 = vpop.f32.mrf.mxu0
        %v888 = vadd.f32 0.0, %v887
        %v889 = vpop.f32.mrf.mxu0
        %v890 = vadd.f32 0.0, %v889
        %891 = vdwg.mxu0
        %v894 = vunpack.c.l.b16 %v862
        %v895 = vunpack.c.l.b16 %v863
        %v896 = vpack.c.b16 %v895, %v894
        %v898 = vsel %vm635, %v896, 0
        %900 = vmatpush.bf16.msra.mxu0 0
        %901 = vmatpush.bf16.msra.mxu0 0
        %902 = vmatpush.bf16.msra.mxu0 0
        %903 = vmatpush.bf16.msra.mxu0 0
        %904 = vmatpush.bf16.msra.mxu0 0
        %905 = vmatpush.bf16.msra.mxu0 0
        %906 = vmatpush.bf16.msra.mxu0 %v865
        %907 = vmatpush.bf16.msra.mxu0 %v864
        %908 = vmatmul.bf16.gmra.mxu0 %v898
        %v909 = vpop.f32.mrf.mxu0
        %v910 = vadd.f32 %v888, %v909
        %v911 = vpop.f32.mrf.mxu0
        %v912 = vadd.f32 %v890, %v911
        %913 = vdwg.mxu0
        %v914 = vld [vmem:[%s8] sm:$0xff]
        %v915 = vld [vmem:[%s8 + $0x8] sm:$0xff]
        %917 = vset.pattern.permute.xlu0 0
        %918 = vperm.xlu0 %917, %v914
        %v919 = vpop.permute.xlu0 %918
        %922 = vset.pattern.permute.xlu0 0
        %923 = vperm.xlu0 %922, %v915
        %v924 = vpop.permute.xlu0 %923
        %v926 = vadd.f32 %v910, %v919
        %v927 = vadd.f32 %v912, %v924
        %v928 = vmax.f32 %v926, 0.0
        %v929 = vmax.f32 %v927, 0.0
        %930 = vst.msk [vmem:[%s362] sm:$0xff] %vm756, %v928
        %931 = vst.msk [vmem:[%s362 + $0x8] sm:$0xff] %vm756, %v929
        %s932 = sand.u32 %s246, 1
        %s933 = scalar_lea.sflag [#allocation5], %s932
        %s934 = sand.u32 %s246, 1
        %s935 = smul.addr %s934, 16
        %s936 = scalar_lea.vmem [#allocation4], %s935
        // Predicated region
        $region61: #{tpu_custom_call.1} parent=55 // pred_check
          %p937 = pneg %p256
        $region62: #{tpu_custom_call.1} parent=55 // pred_check_branch
          %939 = sbr.rel (%p937) target = $region64
        $region63: #{tpu_custom_call.1} parent=55 // pred_region
          %941 = vsyncadd %s933, 0
          %s942 = smul.addr %s27, 2
          %s943 = sadd.s32 %s28, %s942
          %s944 = smul.addr %s943, 8
          %s945 = scalar_lea.hbm %s9, %s944
          %s946 = sshll.u32 %s936, 4
          %s947 = int_to_ptr.vmem [resolvable:$true] %s946
          %s948 = sshll.u32 %s945, 4
          %s949 = int_to_ptr.hbm [resolvable:$true] %s948
          %954 = dma.vmem_to_hbm [thread:$0]  %s947, 256, %s949, %s933, 128, 128, 8
        $region64: #{tpu_custom_call.1} parent=55 // pred_fallthru
          _
      $region56: #{tpu_custom_call.1} parent=5 // pred_fallthru
        _
      %p955 = scmp.le.s32.totalorder 2, %s18
      // Predicated region
      $region65: #{tpu_custom_call.1} parent=5 // pred_check
        %p956 = pneg %p955
      $region66: #{tpu_custom_call.1} parent=5 // pred_check_branch
        %958 = sbr.rel (%p956) target = $region68
      $region67: #{tpu_custom_call.1} parent=5 // pred_region
        %s959 = ssub.s32 %s18, 2
        // Predicated region
        $region69: #{tpu_custom_call.1} parent=67 // pred_check
          %p960 = pneg %p262
        $region70: #{tpu_custom_call.1} parent=67 // pred_check_branch
          %962 = sbr.rel (%p960) target = $region72
        $region71: #{tpu_custom_call.1} parent=67 // pred_region
          %s963 = sand.u32 %s247, 1
          %s964 = scalar_lea.sflag [#allocation5], %s963
          %s965 = sand.u32 %s247, 1
          %s966 = smul.addr %s965, 16
          %s967 = scalar_lea.vmem [#allocation4], %s966
          %969 = dma.done %s964, 256
        $region72: #{tpu_custom_call.1} parent=67 // pred_fallthru
          _
      $region68: #{tpu_custom_call.1} parent=5 // pred_fallthru
        _
    $region6: #{tpu_custom_call.1} parent=1 // loop_footer
      %s22 = sadd.s32 1, %s18
    $region7: #{tpu_custom_call.1} parent=1 // loop_footer_branch
      %17 = sbr.rel target = $region3
    $region8: #{tpu_custom_call.1} parent=1 // loop_exit
      _
    %970 = vsyncpa [#allocation5], 1
    %s971 = scalar_lea.sflag [#allocation5], 1
    %972 = vsyncpa %s971, 1

</llo_original>
